<compile_context>
chip_gen: v5e
topology: v5e:2x2
jax: 0.10.0
libtpu: 0.0.40
codegen_flags: <defaults>
</compile_context>

<pallas_src>
import functools

import numpy as np
import jax
import jax.numpy as jnp
from jax.experimental import pallas as pl
from jax.experimental.pallas import tpu as pltpu


# ----------------------------------------------------------------------------
# 2D sin-cos positional embedding (same math as MAE/DiT get_2d_sincos_pos_embed,
# generalized to rectangular (Hp, Wp) grids).
# ----------------------------------------------------------------------------
def _get_1d_sincos_pos_embed_from_grid(embed_dim, pos):
    omega = np.arange(embed_dim // 2, dtype=np.float64)
    omega /= embed_dim / 2.0
    omega = 1.0 / 10000 ** omega                        # (D/2,)
    pos = pos.reshape(-1)                               # (M,)
    out = np.einsum("m,d->md", pos, omega)              # (M, D/2)
    return np.concatenate([np.sin(out), np.cos(out)], axis=1)  # (M, D)


def get_2d_sincos_pos_embed(embed_dim, grid_hw):
    """grid_hw = (Hp, Wp); returns (Hp*Wp, embed_dim) float64 numpy array."""
    gh, gw = grid_hw
    grid_h = np.arange(gh, dtype=np.float32)
    grid_w = np.arange(gw, dtype=np.float32)
    grid = np.meshgrid(grid_w, grid_h)                  # w goes first
    grid = np.stack(grid, axis=0).reshape([2, 1, gh, gw])
    emb_h = _get_1d_sincos_pos_embed_from_grid(embed_dim // 2, grid[0])
    emb_w = _get_1d_sincos_pos_embed_from_grid(embed_dim // 2, grid[1])
    return np.concatenate([emb_h, emb_w], axis=1)       # (Hp*Wp, embed_dim)


# ----------------------------------------------------------------------------
# Pallas kernel: row-tiled patch projection + resident (pos_embed + bias) add
# ----------------------------------------------------------------------------
def _ref_encoder_kernel(x_ref, w_ref, pos_ref, o_ref, *, tm, pos_rows):
    # x_ref:   (TM, K)         bf16 patch rows (streamed per grid step)
    # w_ref:   (K, dim)        bf16 flattened patchify weight (resident, const idx)
    # pos_ref: (pos_rows, dim) f32  pos_embed + conv bias (resident, const idx)
    # o_ref:   (TM, dim)       f32  output rows
    y = jnp.dot(x_ref[...], w_ref[...], preferred_element_type=jnp.float32)  # MXU
    if pos_rows == tm:
        # Tile spans whole batch elements -> the resident pos slab is exactly
        # the per-tile pattern; no slicing needed.
        pos = pos_ref[...]
    else:
        # Tile is a sub-range of one batch element: slice the resident pos
        # (period = N rows) in-kernel instead of re-DMA'ing it every step.
        start = pl.multiple_of((pl.program_id(0) * tm) % pos_rows, tm)
        pos = pos_ref[pl.ds(start, tm), :]
    o_ref[...] = (y + pos).astype(o_ref.dtype)                               # VPU


def _choose_tiling(B, N, K, dim):
    """Returns (TM, pos_rows).

    Guarantees: (B*N) % TM == 0; TM is 16-aligned or equals B*N (full block,
    always legal); every tile's pos pattern is either the full resident slab
    (pos_rows == TM) or a TM-aligned window of the N-row slab (pos_rows == N).
    Target 256-1024 rows, capped by a conservative cross-generation VMEM budget
    (v5e ~16 MiB scoped default / v7x 32 MiB scoped, 64 MiB total).
    """
    total = B * N
    bytes_per_row = 2 * (K * 2 + dim * 4)          # double-buffered bf16 x + f32 out
    budget = 8 << 20
    max_rows = max(16, budget // max(bytes_per_row, 1))
    target = int(min(1024, max_rows))

    if total <= target:
        return total, total                        # single full-array tile (always legal)

    if N <= target:
        # Batch-spanning tiles: TM = m * N, pos slab = pos tiled m times.
        m = 1
        for cand in range(min(B, max(1, target // N)), 0, -1):
            if B % cand == 0:
                m = cand
                break
        # Prefer >= 2 grid steps (v7x megacore) if tiles stay >= 256 rows.
        if B // m == 1:
            for cand in range(m - 1, 0, -1):
                if B % cand == 0 and B // cand >= 2 and cand * N >= 256:
                    m = cand
                    break
        tm = m * N
        if tm % 16 != 0 and tm != total:
            return total, total                    # safe fallback: full-array block
        return tm, tm

    # N > target: tile within one batch element; TM | N and TM % 16 == 0.
    for tm in range(target - (target % 16), 0, -16):
        if N % tm == 0:
            return tm, N
    return total, total                            # safe fallback: full-array block


def ref_encoder_forward(x_nchw, w_conv, b_conv, pos_embed, patch_size):
    """x_nchw: (B, C, H, W) f32.  Returns cond_attn (B, N, dim) f32."""
    B, C, H, W = x_nchw.shape
    p = patch_size
    Hp, Wp = H // p, W // p
    N = Hp * Wp
    dim = w_conv.shape[0]
    K = C * p * p

    # --- host-side glue ------------------------------------------------------
    # TODO(synk): the NCHW -> (B*N, K) patch rearrangement requires a 5-D
    # transpose that Mosaic cannot lower in-kernel, so it stays a host-side XLA
    # op (one extra HBM pass); everything downstream is fused in the kernel.
    xp = x_nchw.reshape(B, C, Hp, p, Wp, p)
    xp = jnp.transpose(xp, (0, 2, 4, 1, 3, 5))          # (B, Hp, Wp, C, p, p)
    xp = xp.reshape(B * N, K).astype(jnp.bfloat16)      # rows = B*N, bf16 inputs

    # Flattened Conv2d(kernel=stride=p) weight, (dim, C, p, p) -> (K, dim).
    w_flat = jnp.transpose(w_conv.reshape(dim, K)).astype(jnp.bfloat16)
    # Fold the conv bias into the positional embedding (one resident operand).
    posb = (pos_embed + b_conv[None, :]).astype(jnp.float32)   # (N, dim)

    # --- tiling --------------------------------------------------------------
    TM, P = _choose_tiling(B, N, K, dim)
    if P > N:                                           # batch-spanning tiles
        posb = jnp.tile(posb, (P // N, 1))              # tiny host op, (P, dim)
    num_tiles = (B * N) // TM

    # --- cost estimate (dim, not padded; pos counted once - it is resident) ---
    cost = pl.CostEstimate(
        flops=2 * B * N * K * dim,
        transcendentals=0,
        bytes_accessed=(B * N * K * 2          # x rows (bf16)
                        + K * dim * 2          # weight, fetched once
                        + P * dim * 4          # resident pos slab, fetched once
                        + B * N * dim * 4),    # output (f32)
    )

    # VMEM footprint: double-buffered streaming operands + (budgeted as double-
    # buffered) resident operands.  Only raise the scoped limit when needed.
    vmem_need = (2 * TM * K * 2 + 2 * TM * dim * 4
                 + 2 * K * dim * 2 + 2 * P * dim * 4)
    vmem_limit = int(min(1.5 * vmem_need + (2 << 20), 100 << 20)) \
        if vmem_need > (12 << 20) else None

    kernel = functools.partial(_ref_encoder_kernel, tm=TM, pos_rows=P)

    out = pl.pallas_call(
        kernel,
        out_shape=jax.ShapeDtypeStruct((B * N, dim), jnp.float32),
        grid_spec=pltpu.PrefetchScalarGridSpec(
            num_scalar_prefetch=0,
            grid=(num_tiles,),
            in_specs=[
                pl.BlockSpec((TM, K), lambda i: (i, 0)),     # streamed rows
                pl.BlockSpec((K, dim), lambda i: (0, 0)),    # resident weight
                pl.BlockSpec((P, dim), lambda i: (0, 0)),    # resident pos+bias
            ],
            out_specs=pl.BlockSpec((TM, dim), lambda i: (i, 0)),
        ),
        compiler_params=pltpu.CompilerParams(
            dimension_semantics=("parallel",),
            vmem_limit_bytes=vmem_limit,
        ),
        cost_estimate=cost,
    )(xp, w_flat, posb)

    # (B*N, dim) -> (B, N, dim) is metadata-only; no extra HBM pass.
    return out.reshape(B, N, dim)
    # TODO(synk): init_zero_last=True branch (extra zero-init Linear) not
    # implemented; the default nn.Identity path is what this kernel computes.


if __name__ == "__main__":
    # Small shapes consistent with the module:
    #   img_size=(16,16), in_channels=4, patch_size=4, dim=32
    B, C, H, W = 2, 4, 16, 16
    p, dim = 4, 32
    Hp, Wp = H // p, W // p
    N = Hp * Wp                     # 16 patches per image

    key = jax.random.PRNGKey(0)
    k_x, k_w, k_b = jax.random.split(key, 3)

    x = jax.random.normal(k_x, (B, C, H, W), dtype=jnp.float32)
    # PatchifyPS projection parameters (Conv2d(in=C, out=dim, k=p, s=p)).
    w_conv = jax.random.normal(k_w, (dim, C, p, p), dtype=jnp.float32) * 0.02
    b_conv = jax.random.normal(k_b, (dim,), dtype=jnp.float32) * 0.02

    pos_embed = jnp.asarray(
        get_2d_sincos_pos_embed(dim, (Hp, Wp)), dtype=jnp.float32)   # (N, dim)

    out = ref_encoder_forward(x, w_conv, b_conv, pos_embed, p)
    out = jax.block_until_ready(out)

    # Pure-JAX reference of the same math (same bf16 inputs / f32 accumulation).
    xp = x.reshape(B, C, Hp, p, Wp, p).transpose(0, 2, 4, 1, 3, 5).reshape(B, N, -1)
    w_flat = w_conv.reshape(dim, -1).T                               # (K, dim)
    ref = jnp.dot(xp.astype(jnp.bfloat16),
                  w_flat.astype(jnp.bfloat16),
                  preferred_element_type=jnp.float32)
    ref = ref + b_conv[None, None, :] + pos_embed[None]
    np.testing.assert_allclose(np.asarray(out), np.asarray(ref),
                               rtol=5e-3, atol=5e-3)

    assert out.shape == (B, N, dim)
    print("KERNEL_OK")
</pallas_src>

<mosaic_0001>
module attributes {stable_mosaic.version = 11 : i64} {
  func.func @_ref_encoder_kernel(%arg0: i32, %arg1: memref<32x64xbf16, #tpu.memory_space<vmem>>, %arg2: memref<64x32xbf16, #tpu.memory_space<vmem>>, %arg3: memref<32x32xf32, #tpu.memory_space<vmem>>, %arg4: memref<32x32xf32, #tpu.memory_space<vmem>>) attributes {dimension_semantics = [#tpu.dimension_semantics<parallel>], iteration_bounds = array<i64: 1>, scalar_prefetch = 0 : i64, scratch_operands = 0 : i64, tpu.core_type = #tpu.core_type<tc>, window_params = [{transform_indices = @transform_0, window_bounds = array<i64: 32, 64>}, {pipeline_mode = #tpu.pipeline_mode<synchronous>, transform_indices = @transform_1, window_bounds = array<i64: 64, 32>}, {pipeline_mode = #tpu.pipeline_mode<synchronous>, transform_indices = @transform_2, window_bounds = array<i64: 32, 32>}, {transform_indices = @transform_3, window_bounds = array<i64: 32, 32>}]} {
    %c0 = arith.constant 0 : index
    %c0_0 = arith.constant 0 : index
    %0 = vector.load %arg1[%c0, %c0_0] : memref<32x64xbf16, #tpu.memory_space<vmem>>, vector<32x64xbf16>
    %c0_1 = arith.constant 0 : index
    %c0_2 = arith.constant 0 : index
    %1 = vector.load %arg2[%c0_1, %c0_2] : memref<64x32xbf16, #tpu.memory_space<vmem>>, vector<64x32xbf16>
    %cst = arith.constant dense<0.000000e+00> : vector<32x32xf32>
    %2 = tpu.matmul %0, %1, %cst {dimension_numbers = #tpu.dot_dimension_numbers<[1], [0], [0], [1], [0, 0, 1, 1], [], []>} : vector<32x64xbf16>, vector<64x32xbf16>, vector<32x32xf32> -> vector<32x32xf32>
    %c0_3 = arith.constant 0 : index
    %c0_4 = arith.constant 0 : index
    %3 = vector.load %arg3[%c0_3, %c0_4] : memref<32x32xf32, #tpu.memory_space<vmem>>, vector<32x32xf32>
    %4 = arith.addf %2, %3 : vector<32x32xf32>
    %c0_5 = arith.constant 0 : index
    %c0_6 = arith.constant 0 : index
    %5 = vector.load %arg4[%c0_5, %c0_6] : memref<32x32xf32, #tpu.memory_space<vmem>>, vector<32x32xf32>
    tpu.vector_store %arg4[%c0_5, %c0_6], %4 {strides = array<i32>} : memref<32x32xf32, #tpu.memory_space<vmem>>, vector<32x32xf32>,
    return
  }
  func.func @transform_0(%arg0: i32) -> (i32, i32) {
    %c0_i32 = arith.constant 0 : i32
    %c0_i32_0 = arith.constant 0 : i32
    return %arg0, %c0_i32 : i32, i32
  }
  func.func @transform_1(%arg0: i32) -> (i32, i32) {
    %c0_i32 = arith.constant 0 : i32
    %c0_i32_0 = arith.constant 0 : i32
    %c0_i32_1 = arith.constant 0 : i32
    return %c0_i32, %c0_i32_0 : i32, i32
  }
  func.func @transform_2(%arg0: i32) -> (i32, i32) {
    %c0_i32 = arith.constant 0 : i32
    %c0_i32_0 = arith.constant 0 : i32
    %c0_i32_1 = arith.constant 0 : i32
    return %c0_i32, %c0_i32_0 : i32, i32
  }
  func.func @transform_3(%arg0: i32) -> (i32, i32) {
    %c0_i32 = arith.constant 0 : i32
    %c0_i32_0 = arith.constant 0 : i32
    return %arg0, %c0_i32 : i32, i32
  }
}

</mosaic_0001>

<llo_original>
// kernel: tpu_custom_call.1
$region0: #{tpu_custom_call.1}
  #allocation0 [shape = 'u32[]', space=smem, size = 0x4, offset = 0x4, fixed_abs, tag = 'smem constant byte address 0x4 - core index']
  #allocation1 [shape = 'u32[72,128]{1,0:T(1,128)}', space=vmem, size = 0x9000, scoped, tag = 'internal scratch']
  %s0 = inlined_call_operand.vmem [shape: bf16[32,64], index: 0, kind: input, shape index: {}]
  %s1 = inlined_call_operand.vmem [shape: bf16[64,32], index: 1, kind: input, shape index: {}]
  %s2 = inlined_call_operand.vmem [shape: f32[32,32], index: 2, kind: input, shape index: {}]
  %s3 = inlined_call_operand.hbm [shape: f32[32,32], index: 3, kind: output, shape index: {}]
  %s4 = sld [smem:[#allocation0]]
  $region22: #{tpu_custom_call.1} parent=0
    _
  %s6 = ssub.s32 1, %s4
  %s7 = scalar_select 0, %s6, %s4
  $region1: #{tpu_custom_call.1} parent=0
    #allocation2 [shape = 'u8[16384]{0}', space=vmem, size = 0x4000, scoped, tag = 'output window, operand 0, single buffered']
    #allocation3 [shape = 's32[1]{0}', space=sflag, size = 0x4, scoped, tag = 'scoped memory for tpu_custom_call.1']
    %8 = vsyncpa [#allocation3], 0
    // Predicated region
    $region2: #{tpu_custom_call.1} parent=1 // pred_check
      _
    $region3: #{tpu_custom_call.1} parent=1 // pred_check_branch
      %10 = sbr.rel (0) target = $region5
    $region4: #{tpu_custom_call.1} parent=1 // pred_region
      _
    $region5: #{tpu_custom_call.1} parent=1 // pred_fallthru
      _
    // Predicated region
    $region6: #{tpu_custom_call.1} parent=1 // pred_check
      _
    $region7: #{tpu_custom_call.1} parent=1 // pred_check_branch
      %12 = sbr.rel (0) target = $region9
    $region8: #{tpu_custom_call.1} parent=1 // pred_region
      _
    $region9: #{tpu_custom_call.1} parent=1 // pred_fallthru
      _
    // Predicated region
    $region10: #{tpu_custom_call.1} parent=1 // pred_check
      _
    $region11: #{tpu_custom_call.1} parent=1 // pred_check_branch
      %14 = sbr.rel (0) target = $region13
    $region12: #{tpu_custom_call.1} parent=1 // pred_region
      _
    $region13: #{tpu_custom_call.1} parent=1 // pred_fallthru
      _
    %v16 = vld [vmem:[%s0] sm:$0xf]
    %v17 = vld [vmem:[%s0 + $0x4] sm:$0xf]
    %v18 = vld [vmem:[%s0 + $0x8] sm:$0xf]
    %v19 = vld [vmem:[%s0 + $0xc] sm:$0xf]
    %v20 = vld [vmem:[%s1] sm:$0xf]
    %v21 = vld [vmem:[%s1 + $0x4] sm:$0xf]
    %v22 = vld [vmem:[%s1 + $0x8] sm:$0xf]
    %v23 = vld [vmem:[%s1 + $0xc] sm:$0xf]
    %v24 = vld [vmem:[%s1 + $0x10] sm:$0xf]
    %v25 = vld [vmem:[%s1 + $0x14] sm:$0xf]
    %v26 = vld [vmem:[%s1 + $0x18] sm:$0xf]
    %v27 = vld [vmem:[%s1 + $0x1c] sm:$0xf]
    %v28 = vld [vmem:[%s2] sm:$0xff]
    %v29 = vld [vmem:[%s2 + $0x8] sm:$0xff]
    %v30 = vld [vmem:[%s2 + $0x10] sm:$0xff]
    %v31 = vld [vmem:[%s2 + $0x18] sm:$0xff]
    %v36 = vunpack.c.l.b16 %v16
    %v37 = vunpack.c.l.b16 %v17
    %v38 = vunpack.c.l.b16 %v18
    %v39 = vunpack.c.l.b16 %v19
    %v40 = vpack.c.b16 %v37, %v36
    %v41 = vpack.c.b16 %v39, %v38
    %v50 = vunpack.c.l.b16 %v20
    %v51 = vunpack.c.l.b16 %v21
    %v52 = vunpack.c.l.b16 %v22
    %v53 = vunpack.c.l.b16 %v23
    %v54 = vunpack.c.l.b16 %v24
    %v55 = vunpack.c.l.b16 %v25
    %v56 = vunpack.c.l.b16 %v26
    %v57 = vunpack.c.l.b16 %v27
    %v58 = vpack.c.b16 %v51, %v50
    %v59 = vpack.c.b16 %v53, %v52
    %v60 = vpack.c.b16 %v55, %v54
    %v61 = vpack.c.b16 %v57, %v56
    %vm66 = vcmask 523264
    %v68 = vsel %vm66, %v40, 0
    %v71 = vsel %vm66, %v41, 0
    %73 = vmatpush.bf16.msra.mxu0 0
    %74 = vmatpush.bf16.msra.mxu0 0
    %75 = vmatpush.bf16.msra.mxu0 0
    %76 = vmatpush.bf16.msra.mxu0 0
    %77 = vmatpush.bf16.msra.mxu0 %v61
    %78 = vmatpush.bf16.msra.mxu0 %v60
    %79 = vmatpush.bf16.msra.mxu0 %v59
    %80 = vmatpush.bf16.msra.mxu0 %v58
    %81 = vmatmul.bf16.gmra.mxu0 %v68
    %v82 = vpop.f32.mrf.mxu0
    %v83 = vadd.f32 %v28, %v82
    %v84 = vpop.f32.mrf.mxu0
    %v85 = vadd.f32 %v29, %v84
    %86 = vmatmul.bf16.gmra.mxu0 %v71
    %v87 = vpop.f32.mrf.mxu0
    %v88 = vadd.f32 %v30, %v87
    %v89 = vpop.f32.mrf.mxu0
    %v90 = vadd.f32 %v31, %v89
    %91 = vdwg.mxu0
    %vm92 = vcmask 261120
    %93 = vst.msk [vmem:[#allocation2] sm:$0xff] %vm92, %v83
    %94 = vst.msk [vmem:[#allocation2 + $0x8] sm:$0xff] %vm92, %v85
    %95 = vst.msk [vmem:[#allocation2 + $0x10] sm:$0xff] %vm92, %v88
    %96 = vst.msk [vmem:[#allocation2 + $0x18] sm:$0xff] %vm92, %v90
    // Predicated region
    $region14: #{tpu_custom_call.1} parent=1 // pred_check
      _
    $region15: #{tpu_custom_call.1} parent=1 // pred_check_branch
      %98 = sbr.rel (0) target = $region17
    $region16: #{tpu_custom_call.1} parent=1 // pred_region
      %100 = vsyncadd [#allocation3], 0
      %s101 = sshll.u32 [#allocation2], 4
      %s102 = int_to_ptr.vmem [resolvable:$true] %s101
      %s103 = sshll.u32 %s3, 4
      %s104 = int_to_ptr.hbm [resolvable:$true] %s103
      %109 = dma.vmem_to_hbm [thread:$0]  %s102, 512, %s104, [#allocation3], 128, 128, 8
    $region17: #{tpu_custom_call.1} parent=1 // pred_fallthru
      _
    // Predicated region
    $region18: #{tpu_custom_call.1} parent=1 // pred_check
      _
    $region19: #{tpu_custom_call.1} parent=1 // pred_check_branch
      %111 = sbr.rel (0) target = $region21
    $region20: #{tpu_custom_call.1} parent=1 // pred_region
      %113 = dma.done [#allocation3], 512
    $region21: #{tpu_custom_call.1} parent=1 // pred_fallthru
      _
    %114 = vsyncpa [#allocation3], 1

</llo_original>
